<compile_context>
chip_gen: v5e
topology: v5e:2x2
jax: 0.10.0
libtpu: 0.0.40
codegen_flags: <defaults>
</compile_context>

<pallas_src>
import math

import jax
import jax.numpy as jnp
import numpy as np
from jax.experimental import pallas as pl
from jax.experimental.pallas import tpu as pltpu

_LANE = 128


def _gauss_edge_kernel(log_factor, inv_4e2):
    def kernel(x0_ref, x1_ref, o_ref):
        # x0_ref / x1_ref: [d, TE]  (gathered endpoint features, lane axis = edges)
        diff = x0_ref[...] - x1_ref[...]
        sq = jnp.sum(diff * diff, axis=0, keepdims=True)   # [1, TE] sublane reduce
        dist = jnp.sqrt(sq)                                 # un-squared L2 (matches spec)
        # factor * exp(-dist/(4 eps^2)) == exp(log_factor - dist * inv_4e2)
        o_ref[...] = jnp.exp(log_factor - dist * inv_4e2).astype(o_ref.dtype)
    return kernel


def _pick_tile_e(d, E, target_bytes=2 * 1024 * 1024, max_tile=8192):
    """Bytes-derived edge-tile width (multiple of 128 lanes)."""
    e_pad_unit = pl.cdiv(E, _LANE) * _LANE            # minimal lane-padded extent
    t = (target_bytes // max(d * 4, 1)) // _LANE * _LANE
    t = max(_LANE, min(t, max_tile, e_pad_unit))
    # Keep >= 2 grid steps when E allows, so both v7x TensorCores get work.
    if pl.cdiv(e_pad_unit, t) < 2 and e_pad_unit >= 2 * _LANE:
        t = pl.cdiv(pl.cdiv(e_pad_unit, 2), _LANE) * _LANE
    return int(t)


def sp_graph_gauss_kernel_layer(x, edge, epsilon=1.0, tile_e=None):
    """x: [N, d] float32, edge: [2, E] int32 -> [E] float32."""
    x = x.astype(jnp.float32)
    N, d = x.shape
    E = edge.shape[1]

    if tile_e is None:
        tile_e = _pick_tile_e(d, E)

    e_pad = pl.cdiv(E, tile_e) * tile_e
    pad = e_pad - E

    # Pad the cheap int32 index vectors instead of the gathered feature arrays.
    e0 = edge[0].astype(jnp.int32)
    e1 = edge[1].astype(jnp.int32)
    if pad:
        e0 = jnp.pad(e0, (0, pad))
        e1 = jnp.pad(e1, (0, pad))

    # Gather directly into the [d, E] lane-major layout the kernel consumes.
    xt = x.T                                  # tiny [d, N]
    x0 = jnp.take(xt, e0, axis=1)             # [d, e_pad]
    x1 = jnp.take(xt, e1, axis=1)             # [d, e_pad]

    log_factor = -(d / 2.0) * math.log(4.0 * math.pi * epsilon ** 2)
    inv_4e2 = 1.0 / (4.0 * epsilon ** 2)

    cost = pl.CostEstimate(
        flops=3 * d * e_pad + 4 * e_pad,
        transcendentals=2 * e_pad,                       # sqrt + exp per edge
        bytes_accessed=2 * d * e_pad * 4 + e_pad * 4,
    )

    out = pl.pallas_call(
        _gauss_edge_kernel(log_factor, inv_4e2),
        out_shape=jax.ShapeDtypeStruct((1, e_pad), jnp.float32),
        grid=(e_pad // tile_e,),
        in_specs=[
            pl.BlockSpec((d, tile_e), lambda i: (0, i)),
            pl.BlockSpec((d, tile_e), lambda i: (0, i)),
        ],
        out_specs=pl.BlockSpec((1, tile_e), lambda i: (0, i)),
        compiler_params=pltpu.CompilerParams(
            dimension_semantics=("parallel",)),
        cost_estimate=cost,
    )(x0, x1)

    return out[0, :E]


def _reference(x, edge, epsilon=1.0):
    d = x.shape[1]
    diff = x[edge[0], :] - x[edge[1], :]
    dist = jnp.linalg.norm(diff, ord=2, axis=1)
    factor = 1.0 / (4.0 * math.pi * epsilon ** 2) ** (d / 2.0)
    return factor * jnp.exp(-dist / (4.0 * epsilon ** 2))


if __name__ == "__main__":
    key = jax.random.PRNGKey(0)
    k_x, k_e0, k_e1 = jax.random.split(key, 3)

    N, d, E = 32, 8, 64                       # small graph: 32 nodes, 8 feats, 64 edges
    x = jax.random.normal(k_x, (N, d), dtype=jnp.float32)
    edge = jnp.stack(
        [jax.random.randint(k_e0, (E,), 0, N, dtype=jnp.int32),
         jax.random.randint(k_e1, (E,), 0, N, dtype=jnp.int32)],
        axis=0,
    )

    out = sp_graph_gauss_kernel_layer(x, edge, epsilon=1.0)
    out = jax.block_until_ready(out)

    ref = _reference(x, edge, epsilon=1.0)
    np.testing.assert_allclose(np.asarray(out), np.asarray(ref),
                               rtol=1e-5, atol=1e-6)
    assert out.shape == (E,) and out.dtype == jnp.float32

    print("KERNEL_OK")
</pallas_src>

<mosaic_0001>
module attributes {stable_mosaic.version = 11 : i64} {
  func.func @kernel(%arg0: i32, %arg1: memref<8x128xf32, #tpu.memory_space<vmem>>, %arg2: memref<8x128xf32, #tpu.memory_space<vmem>>, %arg3: memref<1x128xf32, #tpu.memory_space<vmem>>) attributes {dimension_semantics = [#tpu.dimension_semantics<parallel>], iteration_bounds = array<i64: 1>, scalar_prefetch = 0 : i64, scratch_operands = 0 : i64, tpu.core_type = #tpu.core_type<tc>, window_params = [{transform_indices = @transform_0, window_bounds = array<i64: 8, 128>}, {transform_indices = @transform_1, window_bounds = array<i64: 8, 128>}, {transform_indices = @transform_2, window_bounds = array<i64: 1, 128>}]} {
    %c0 = arith.constant 0 : index
    %c0_0 = arith.constant 0 : index
    %0 = vector.load %arg1[%c0, %c0_0] : memref<8x128xf32, #tpu.memory_space<vmem>>, vector<8x128xf32>
    %c0_1 = arith.constant 0 : index
    %c0_2 = arith.constant 0 : index
    %1 = vector.load %arg2[%c0_1, %c0_2] : memref<8x128xf32, #tpu.memory_space<vmem>>, vector<8x128xf32>
    %2 = arith.subf %0, %1 : vector<8x128xf32>
    %3 = arith.mulf %2, %2 : vector<8x128xf32>
    %cst = arith.constant dense<0.000000e+00> : vector<128xf32>
    %4 = vector.multi_reduction <add>, %3, %cst [0] : vector<8x128xf32> to vector<128xf32>
    %5 = vector.shape_cast %4 : vector<128xf32> to vector<1x128xf32>
    %6 = math.sqrt %5 : vector<1x128xf32>
    %cst_3 = arith.constant 2.500000e-01 : f32
    %7 = vector.broadcast %cst_3 : f32 to vector<1x128xf32>
    %8 = arith.mulf %6, %7 : vector<1x128xf32>
    %cst_4 = arith.constant -10.1240969 : f32
    %9 = vector.broadcast %cst_4 : f32 to vector<1x128xf32>
    %10 = arith.subf %9, %8 : vector<1x128xf32>
    %11 = math.exp %10 : vector<1x128xf32>
    %c0_5 = arith.constant 0 : index
    %c0_6 = arith.constant 0 : index
    %12 = vector.load %arg3[%c0_5, %c0_6] : memref<1x128xf32, #tpu.memory_space<vmem>>, vector<1x128xf32>
    tpu.vector_store %arg3[%c0_5, %c0_6], %11 {strides = array<i32>} : memref<1x128xf32, #tpu.memory_space<vmem>>, vector<1x128xf32>,
    return
  }
  func.func @transform_0(%arg0: i32) -> (i32, i32) {
    %c0_i32 = arith.constant 0 : i32
    %c0_i32_0 = arith.constant 0 : i32
    return %c0_i32, %arg0 : i32, i32
  }
  func.func @transform_1(%arg0: i32) -> (i32, i32) {
    %c0_i32 = arith.constant 0 : i32
    %c0_i32_0 = arith.constant 0 : i32
    return %c0_i32, %arg0 : i32, i32
  }
  func.func @transform_2(%arg0: i32) -> (i32, i32) {
    %c0_i32 = arith.constant 0 : i32
    %c0_i32_0 = arith.constant 0 : i32
    return %c0_i32, %arg0 : i32, i32
  }
}

</mosaic_0001>

<llo_original>
// kernel: tpu_custom_call.1
$region0: #{tpu_custom_call.1}
  #allocation0 [shape = 'u32[]', space=smem, size = 0x4, offset = 0x4, fixed_abs, tag = 'smem constant byte address 0x4 - core index']
  #allocation1 [shape = 'u32[72,128]{1,0:T(1,128)}', space=vmem, size = 0x9000, scoped, tag = 'internal scratch']
  %s0 = inlined_call_operand.hbm [shape: f32[8,128], index: 0, kind: input, shape index: {}]
  %s1 = inlined_call_operand.hbm [shape: f32[8,128], index: 1, kind: input, shape index: {}]
  %s2 = inlined_call_operand.hbm [shape: f32[1,128], index: 2, kind: output, shape index: {}]
  %s3 = sld [smem:[#allocation0]]
  $region26: #{tpu_custom_call.1} parent=0
    _
  %s5 = ssub.s32 1, %s3
  %s6 = scalar_select 0, %s5, %s3
  $region1: #{tpu_custom_call.1} parent=0
    #allocation2 [shape = 'u8[4096]{0}', space=vmem, size = 0x1000, scoped, tag = 'input window, operand 0, single buffered']
    #allocation3 [shape = 's32[1]{0}', space=sflag, size = 0x4, scoped, tag = 'scoped memory for tpu_custom_call.1']
    #allocation4 [shape = 's32[1]{0}', space=sflag, size = 0x4, scoped, tag = 'scoped memory for tpu_custom_call.1']
    #allocation5 [shape = 'u8[4096]{0}', space=vmem, size = 0x1000, scoped, tag = 'input window, operand 1, single buffered']
    #allocation6 [shape = 's32[1]{0}', space=sflag, size = 0x4, scoped, tag = 'scoped memory for tpu_custom_call.1']
    #allocation7 [shape = 'u8[512]{0}', space=vmem, size = 0x400, scoped, tag = 'output window, operand 0, single buffered']
    %7 = vsyncpa [#allocation3], 0
    %8 = vsyncpa [#allocation6], 0
    %9 = vsyncpa [#allocation4], 0
    // Predicated region
    $region2: #{tpu_custom_call.1} parent=1 // pred_check
      _
    $region3: #{tpu_custom_call.1} parent=1 // pred_check_branch
      %11 = sbr.rel (0) target = $region5
    $region4: #{tpu_custom_call.1} parent=1 // pred_region
      %13 = vsyncadd [#allocation3], 0
      %s15 = sshll.u32 %s0, 4
      %s16 = int_to_ptr.hbm [resolvable:$true] %s15
      %s17 = sshll.u32 [#allocation2], 4
      %s18 = int_to_ptr.vmem [resolvable:$true] %s17
      %20 = dma.hbm_to_vmem [thread:$0]  %s16, 128, %s18, [#allocation3]
    $region5: #{tpu_custom_call.1} parent=1 // pred_fallthru
      _
    // Predicated region
    $region6: #{tpu_custom_call.1} parent=1 // pred_check
      _
    $region7: #{tpu_custom_call.1} parent=1 // pred_check_branch
      %22 = sbr.rel (0) target = $region9
    $region8: #{tpu_custom_call.1} parent=1 // pred_region
      %24 = vsyncadd [#allocation6], 0
      %s26 = sshll.u32 %s1, 4
      %s27 = int_to_ptr.hbm [resolvable:$true] %s26
      %s28 = sshll.u32 [#allocation5], 4
      %s29 = int_to_ptr.vmem [resolvable:$true] %s28
      %31 = dma.hbm_to_vmem [thread:$0]  %s27, 128, %s29, [#allocation6]
    $region9: #{tpu_custom_call.1} parent=1 // pred_fallthru
      _
    // Predicated region
    $region10: #{tpu_custom_call.1} parent=1 // pred_check
      _
    $region11: #{tpu_custom_call.1} parent=1 // pred_check_branch
      %33 = sbr.rel (0) target = $region13
    $region12: #{tpu_custom_call.1} parent=1 // pred_region
      %35 = dma.done [#allocation3], 128
    $region13: #{tpu_custom_call.1} parent=1 // pred_fallthru
      _
    // Predicated region
    $region14: #{tpu_custom_call.1} parent=1 // pred_check
      _
    $region15: #{tpu_custom_call.1} parent=1 // pred_check_branch
      %37 = sbr.rel (0) target = $region17
    $region16: #{tpu_custom_call.1} parent=1 // pred_region
      %39 = dma.done [#allocation6], 128
    $region17: #{tpu_custom_call.1} parent=1 // pred_fallthru
      _
    %v40 = vld [vmem:[#allocation2] sm:$0xff]
    %v41 = vld [vmem:[#allocation5] sm:$0xff]
    %v42 = vsub.f32 %v40, %v41
    %v43 = vmul.f32 %v42, %v42
    %v44 = vrot.slane %v43, 4
    %v45 = vadd.f32 %v43, %v44
    %v46 = vrot.slane %v45, 2
    %v47 = vadd.f32 %v45, %v46
    %v48 = vrot.slane %v47, 1
    %v49 = vadd.f32 %v47, %v48
    %v50 = vrsqrt.pop %v49
    %v51 = vmul.f32 %v50, %v49
    %v52 = vmul.f32 %v51, %v50
    %v53 = vmul.f32 0.5, %v52
    %v54 = vsub.f32 1.5, %v53
    %v55 = vmul.f32 %v50, %v54
    %v56 = vmul.f32 %v49, %v55
    %vm57 = vcmp.eq.f32.partialorder %v49, inf
    %v58 = vsel %vm57, %v49, %v56
    %vm59 = vcmp.eq.f32.partialorder %v49, 0.0
    %v60 = vand.u32 %v49, 2147483648
    %v61 = vsel %vm59, %v60, %v58
    %v62 = vmul.f32 %v61, 0.25
    %v63 = vsub.f32 -10.124097, %v62
    %v64 = vmul.f32 %v63, 1.442695
    %v65 = vpow.pop %v64
    %66 = vst [vmem:[#allocation7] sm:$0x1] %v65
    // Predicated region
    $region18: #{tpu_custom_call.1} parent=1 // pred_check
      _
    $region19: #{tpu_custom_call.1} parent=1 // pred_check_branch
      %68 = sbr.rel (0) target = $region21
    $region20: #{tpu_custom_call.1} parent=1 // pred_region
      %70 = vsyncadd [#allocation4], 0
      %s72 = sshll.u32 [#allocation7], 4
      %s73 = int_to_ptr.vmem [resolvable:$true] %s72
      %s74 = sshll.u32 %s2, 4
      %s75 = int_to_ptr.hbm [resolvable:$true] %s74
      %77 = dma.vmem_to_hbm [thread:$0]  %s73, 16, %s75, [#allocation4]
    $region21: #{tpu_custom_call.1} parent=1 // pred_fallthru
      _
    // Predicated region
    $region22: #{tpu_custom_call.1} parent=1 // pred_check
      _
    $region23: #{tpu_custom_call.1} parent=1 // pred_check_branch
      %79 = sbr.rel (0) target = $region25
    $region24: #{tpu_custom_call.1} parent=1 // pred_region
      %81 = dma.done [#allocation4], 16
    $region25: #{tpu_custom_call.1} parent=1 // pred_fallthru
      _
    %82 = vsyncpa [#allocation3], 1
    %83 = vsyncpa [#allocation6], 1
    %84 = vsyncpa [#allocation4], 1

</llo_original>
